<compile_context>
chip_gen: v7x
topology: tpu7x:2x2x1
jax: 0.10.0
libtpu: 0.0.40
codegen_flags: <defaults>
</compile_context>

<pallas_src>
import jax
import jax.numpy as jnp
from jax import lax
from jax.experimental import pallas as pl
from jax.experimental.pallas import tpu as pltpu

EPS = 0.1


# ---------------------------------------------------------------------------
# Prologue: suppressed-neuron mask from the last-token hidden states.
# ---------------------------------------------------------------------------
def _make_mask_kernel(B):
    def kernel(hs_last_ref, wo_ref, winv_ref, mask_ref, acc_ref):
        """Grid axis 0 iterates vocab tiles (reduction -> 'arbitrary').

        hs_last_ref : [L*B, H]        last-token hidden states, all layers
        wo_ref      : [tV, H]         vocab tile of the output embedding
        winv_ref    : [H, tV]         matching vocab tile of pinv(Wo)
        mask_ref    : [(L-1)*B, H]    output mask (written at last step)
        acc_ref     : [(L-1)*B, H]    f32 accumulator for dinv
        """
        v = pl.program_id(0)

        @pl.when(v == 0)
        def _():
            acc_ref[...] = jnp.zeros_like(acc_ref)

        hs_last = hs_last_ref[...]                       # [L*B, H]
        wo = wo_ref[...]                                 # [tV, H]
        winv = winv_ref[...]                             # [H, tV]

        # linear(x, Wo) == x @ Wo.T : contract on H (dim 1 of both operands).
        dims = (((1,), (1,)), ((), ()))
        logits = lax.dot_general(hs_last, wo, dims,
                                 preferred_element_type=jnp.float32)   # [L*B, tV]

        # diff along the layer axis in the flattened (l, b) layout.
        diffs = logits[B:, :] - logits[:-B, :]                          # [(L-1)*B, tV]

        # linear(diffs, Wo_inv) == diffs @ Wo_inv.T : contract on the vocab
        # tile; partial sums over vocab tiles accumulate in f32.
        dinv_part = lax.dot_general(diffs, winv, dims,
                                    preferred_element_type=jnp.float32)  # [(L-1)*B, H]
        acc_ref[...] += dinv_part

        @pl.when(v == pl.num_programs(0) - 1)
        def _():
            mask_ref[...] = (acc_ref[...] > EPS).astype(mask_ref.dtype)

    return kernel


def _choose_vocab_tile(V, H, bytes_per_elem=4, budget_bytes=8 * 1024 * 1024):
    """Largest multiple-of-128 divisor of V whose double-buffered Wo/Wo_inv
    tiles fit the budget; fall back to the full vocab."""
    per_col = 4 * H * bytes_per_elem          # wo + winv, double-buffered
    max_tv = max(1, budget_bytes // per_col)
    if V <= max_tv:
        return V
    tv = (max_tv // 128) * 128
    while tv >= 128:
        if V % tv == 0:
            return tv
        tv -= 128
    return V


def compute_suppression_mask(hs_last, w_out, w_inv, out_dtype):
    """hs_last: [L, B, H]; w_out: [V, H]; w_inv: [H, V] -> mask [L-1, B, H]."""
    L, B, H = hs_last.shape
    V = w_out.shape[0]
    tV = _choose_vocab_tile(V, H)

    hs_last_flat = hs_last.reshape(L * B, H)

    mask_flat = pl.pallas_call(
        _make_mask_kernel(B),
        out_shape=jax.ShapeDtypeStruct(((L - 1) * B, H), out_dtype),
        grid_spec=pltpu.PrefetchScalarGridSpec(
            num_scalar_prefetch=0,
            grid=(V // tV,),
            in_specs=[
                pl.BlockSpec((L * B, H), lambda v: (0, 0)),      # hs_last (resident)
                pl.BlockSpec((tV, H), lambda v: (v, 0)),          # Wo tile
                pl.BlockSpec((H, tV), lambda v: (0, v)),          # Wo_inv tile
            ],
            out_specs=pl.BlockSpec(((L - 1) * B, H), lambda v: (0, 0)),
            scratch_shapes=[pltpu.VMEM(((L - 1) * B, H), jnp.float32)],
        ),
        compiler_params=pltpu.CompilerParams(
            dimension_semantics=("arbitrary",)),
    )(hs_last_flat, w_out, w_inv)

    return mask_flat.reshape(L - 1, B, H)


# ---------------------------------------------------------------------------
# Streaming kernel: hs[1:] * mask, broadcast over tokens.
# ---------------------------------------------------------------------------
def _apply_mask_kernel(mask_ref, hs_ref, out_ref):
    """mask_ref: [1, B, H]; hs_ref/out_ref: [1, B, tT, H]."""
    out_ref[...] = hs_ref[...] * mask_ref[...][:, :, None, :]


def _choose_token_tile(B, T, H, bytes_per_elem, budget_bytes=16 * 1024 * 1024):
    """Largest multiple-of-8 divisor of T whose double-buffered in+out slabs
    fit the budget (safe for v7x's smaller VMEM); fall back to full T."""
    per_row = 4 * B * H * bytes_per_elem      # in + out, double-buffered
    max_tt = max(1, budget_bytes // per_row)
    if T <= max_tt:
        return T
    tt = (max_tt // 8) * 8
    while tt >= 8:
        if T % tt == 0:
            return tt
        tt -= 8
    return T


def supressed_activations_pallas(hs, w_out, w_inv):
    """hs: [L, B, T, H]; w_out: [V, H]; w_inv: [H, V] -> [L-1, B, T, H]."""
    L, B, T, H = hs.shape
    V = w_out.shape[0]
    assert L >= 2, "need at least two layers"
    assert w_out.shape == (V, H) and w_inv.shape == (H, V)

    # Tiny prologue: [L-1, B, H] mask (weights never enter the streaming kernel).
    hs_last = hs[:, :, -1, :]                             # [L, B, H] (glue slice)
    mask = compute_suppression_mask(hs_last, w_out, w_inv, hs.dtype)

    tT = _choose_token_tile(B, T, H, jnp.dtype(hs.dtype).itemsize)

    out = pl.pallas_call(
        _apply_mask_kernel,
        out_shape=jax.ShapeDtypeStruct((L - 1, B, T, H), hs.dtype),
        grid_spec=pltpu.PrefetchScalarGridSpec(
            num_scalar_prefetch=0,
            grid=(L - 1, T // tT),
            in_specs=[
                pl.BlockSpec((1, B, H), lambda i, t: (i, 0, 0)),          # mask[i]
                pl.BlockSpec((1, B, tT, H), lambda i, t: (i + 1, 0, t, 0)),  # hs[i+1]
            ],
            out_specs=pl.BlockSpec((1, B, tT, H), lambda i, t: (i, 0, t, 0)),
        ),
        compiler_params=pltpu.CompilerParams(
            dimension_semantics=("parallel", "parallel"),
            vmem_limit_bytes=48 * 1024 * 1024),
    )(mask, hs)
    return out


class SupressedHSTransformPallas:
    """Deterministically initialized stand-in for the PyTorch module."""

    def __init__(self, hidden: int, vocab: int, key):
        # Synthetic "output embedding" weight; pinverse computed in plain JAX (glue).
        self.Wo = (jax.random.normal(key, (vocab, hidden), dtype=jnp.float32) * 0.02)
        self.Wo_inv = jnp.linalg.pinv(self.Wo.astype(jnp.float32))  # [hidden, vocab]

    def __call__(self, x: dict) -> dict:
        keys = sorted(list(x.keys()), key=lambda k: int(k))
        hs = jnp.stack([x[k] for k in keys], axis=0)  # [L, B, T, H]
        out = supressed_activations_pallas(hs, self.Wo, self.Wo_inv)
        return {k: out[i] for i, k in enumerate(keys[1:])}


def _reference(hs, w_out, w_inv):
    """Pure-JAX mirror of get_supressed_activations for verification."""
    last = hs[:, :, -1:, :]                                   # [L, B, 1, H]
    logits = jnp.einsum('lbth,vh->lbtv', last, w_out)         # [L, B, 1, V]
    diffs = logits[1:] - logits[:-1]                          # [L-1, B, 1, V]
    dinv = jnp.einsum('lbtv,hv->lbth', diffs, w_inv)          # [L-1, B, 1, H]
    mask = (dinv > EPS).astype(hs.dtype)
    return hs[1:] * mask                                      # broadcast over T


if __name__ == "__main__":
    L, B, T, H, V = 3, 2, 8, 128, 256

    key = jax.random.PRNGKey(0)
    k_w, *k_hs = jax.random.split(key, 1 + L)

    module = SupressedHSTransformPallas(hidden=H, vocab=V, key=k_w)

    # Dict of per-layer hidden states, keyed by layer index strings.
    x = {str(i): jax.random.normal(k_hs[i], (B, T, H), dtype=jnp.float32)
         for i in range(L)}

    out = module(x)
    out = {k: jax.block_until_ready(v) for k, v in out.items()}

    # Correctness check against pure-JAX reference.
    hs = jnp.stack([x[str(i)] for i in range(L)], axis=0)
    ref = _reference(hs, module.Wo, module.Wo_inv)
    for i, k in enumerate(sorted(out.keys(), key=lambda s: int(s))):
        assert out[k].shape == (B, T, H)
        if not jnp.allclose(out[k], ref[i], atol=1e-5, rtol=1e-5):
            raise AssertionError(f"mismatch at layer key {k}")

    print("KERNEL_OK")
</pallas_src>

<mosaic_0001>
module attributes {stable_mosaic.version = 11 : i64} {
  func.func @kernel(%arg0: i32, %arg1: memref<6x128xf32, #tpu.memory_space<vmem>>, %arg2: memref<256x128xf32, #tpu.memory_space<vmem>>, %arg3: memref<128x256xf32, #tpu.memory_space<vmem>>, %arg4: memref<4x128xf32, #tpu.memory_space<vmem>>, %arg5: memref<4x128xf32, #tpu.memory_space<vmem>>) attributes {dimension_semantics = [#tpu.dimension_semantics<arbitrary>], iteration_bounds = array<i64: 1>, scalar_prefetch = 0 : i64, scratch_operands = 1 : i64, tpu.core_type = #tpu.core_type<tc>, window_params = [{pipeline_mode = #tpu.pipeline_mode<synchronous>, transform_indices = @transform_0, window_bounds = array<i64: 6, 128>}, {transform_indices = @transform_1, window_bounds = array<i64: 256, 128>}, {transform_indices = @transform_2, window_bounds = array<i64: 128, 256>}, {pipeline_mode = #tpu.pipeline_mode<synchronous>, transform_indices = @transform_3, window_bounds = array<i64: 4, 128>}]} {
    %c0_i32 = arith.constant 0 : i32
    %0 = arith.cmpi eq, %arg0, %c0_i32 : i32
    %1 = arith.extui %0 : i1 to i32
    %c0_i32_0 = arith.constant 0 : i32
    %2 = arith.cmpi ne, %1, %c0_i32_0 : i32
    scf.if %2 {
      %cst_13 = arith.constant 0.000000e+00 : f32
      %17 = vector.broadcast %cst_13 : f32 to vector<4x128xf32>
      %c0_14 = arith.constant 0 : index
      %c0_15 = arith.constant 0 : index
      %18 = vector.load %arg5[%c0_14, %c0_15] : memref<4x128xf32, #tpu.memory_space<vmem>>, vector<4x128xf32>
      tpu.vector_store %arg5[%c0_14, %c0_15], %17 {strides = array<i32>} : memref<4x128xf32, #tpu.memory_space<vmem>>, vector<4x128xf32>,
    } else {
    }
    %c0 = arith.constant 0 : index
    %c0_1 = arith.constant 0 : index
    %3 = vector.load %arg1[%c0, %c0_1] : memref<6x128xf32, #tpu.memory_space<vmem>>, vector<6x128xf32>
    %c0_2 = arith.constant 0 : index
    %c0_3 = arith.constant 0 : index
    %4 = vector.load %arg2[%c0_2, %c0_3] : memref<256x128xf32, #tpu.memory_space<vmem>>, vector<256x128xf32>
    %c0_4 = arith.constant 0 : index
    %c0_5 = arith.constant 0 : index
    %5 = vector.load %arg3[%c0_4, %c0_5] : memref<128x256xf32, #tpu.memory_space<vmem>>, vector<128x256xf32>
    %cst = arith.constant dense<0.000000e+00> : vector<6x256xf32>
    %6 = tpu.matmul %3, %4, %cst {dimension_numbers = #tpu.dot_dimension_numbers<[1], [1], [0], [0], [0, 0, 1, 0], [], []>} : vector<6x128xf32>, vector<256x128xf32>, vector<6x256xf32> -> vector<6x256xf32>
    %7 = vector.extract_strided_slice %6 {offsets = [2, 0], sizes = [4, 256], strides = [1, 1]} : vector<6x256xf32> to vector<4x256xf32>
    %8 = vector.extract_strided_slice %6 {offsets = [0, 0], sizes = [4, 256], strides = [1, 1]} : vector<6x256xf32> to vector<4x256xf32>
    %9 = arith.subf %7, %8 : vector<4x256xf32>
    %cst_6 = arith.constant dense<0.000000e+00> : vector<4x128xf32>
    %10 = tpu.matmul %9, %5, %cst_6 {dimension_numbers = #tpu.dot_dimension_numbers<[1], [1], [0], [0], [0, 0, 1, 0], [], []>} : vector<4x256xf32>, vector<128x256xf32>, vector<4x128xf32> -> vector<4x128xf32>
    %c0_7 = arith.constant 0 : index
    %c0_8 = arith.constant 0 : index
    %11 = vector.load %arg5[%c0_7, %c0_8] : memref<4x128xf32, #tpu.memory_space<vmem>>, vector<4x128xf32>
    %12 = arith.addf %11, %10 : vector<4x128xf32>
    %c0_9 = arith.constant 0 : index
    %c0_10 = arith.constant 0 : index
    %13 = vector.load %arg5[%c0_9, %c0_10] : memref<4x128xf32, #tpu.memory_space<vmem>>, vector<4x128xf32>
    tpu.vector_store %arg5[%c0_9, %c0_10], %12 {strides = array<i32>} : memref<4x128xf32, #tpu.memory_space<vmem>>, vector<4x128xf32>,
    %c0_i32_11 = arith.constant 0 : i32
    %14 = arith.cmpi eq, %arg0, %c0_i32_11 : i32
    %15 = arith.extui %14 : i1 to i32
    %c0_i32_12 = arith.constant 0 : i32
    %16 = arith.cmpi ne, %15, %c0_i32_12 : i32
    scf.if %16 {
      %c0_13 = arith.constant 0 : index
      %c0_14 = arith.constant 0 : index
      %17 = vector.load %arg5[%c0_13, %c0_14] : memref<4x128xf32, #tpu.memory_space<vmem>>, vector<4x128xf32>
      %cst_15 = arith.constant 1.000000e-01 : f32
      %18 = vector.broadcast %cst_15 : f32 to vector<4x128xf32>
      %19 = arith.cmpf ogt, %17, %18 : vector<4x128xf32>
      %20 = arith.extui %19 : vector<4x128xi1> to vector<4x128xi32>
      %21 = arith.sitofp %20 : vector<4x128xi32> to vector<4x128xf32>
      %c0_16 = arith.constant 0 : index
      %c0_17 = arith.constant 0 : index
      %22 = vector.load %arg4[%c0_16, %c0_17] : memref<4x128xf32, #tpu.memory_space<vmem>>, vector<4x128xf32>
      tpu.vector_store %arg4[%c0_16, %c0_17], %21 {strides = array<i32>} : memref<4x128xf32, #tpu.memory_space<vmem>>, vector<4x128xf32>,
    } else {
    }
    return
  }
  func.func @transform_0(%arg0: i32) -> (i32, i32) {
    %c0_i32 = arith.constant 0 : i32
    %c0_i32_0 = arith.constant 0 : i32
    %c0_i32_1 = arith.constant 0 : i32
    return %c0_i32, %c0_i32_0 : i32, i32
  }
  func.func @transform_1(%arg0: i32) -> (i32, i32) {
    %c0_i32 = arith.constant 0 : i32
    %c0_i32_0 = arith.constant 0 : i32
    return %arg0, %c0_i32 : i32, i32
  }
  func.func @transform_2(%arg0: i32) -> (i32, i32) {
    %c0_i32 = arith.constant 0 : i32
    %c0_i32_0 = arith.constant 0 : i32
    return %c0_i32, %arg0 : i32, i32
  }
  func.func @transform_3(%arg0: i32) -> (i32, i32) {
    %c0_i32 = arith.constant 0 : i32
    %c0_i32_0 = arith.constant 0 : i32
    %c0_i32_1 = arith.constant 0 : i32
    return %c0_i32, %c0_i32_0 : i32, i32
  }
}

</mosaic_0001>

<llo_original>
// kernel: tpu_custom_call.1
$region0: #{tpu_custom_call.1}
  #allocation0 [shape = 'u32[]', space=smem, size = 0x4, offset = 0x4, fixed_abs, tag = 'smem constant byte address 0x4 - core index']
  #allocation1 [shape = 'u32[144,128]{1,0:T(1,128)}', space=vmem, size = 0x12000, scoped, tag = 'internal scratch']
  #allocation2 [shape = 'f32[4,128]{1,0:T(4,128)}', space=vmem, size = 0x800, scoped, tag = 'scratch operand']
  %s0 = inlined_call_operand.hbm [shape: f32[6,128], index: 0, kind: input, shape index: {}]
  %s1 = inlined_call_operand.hbm [shape: f32[256,128], index: 1, kind: input, shape index: {}]
  %s2 = inlined_call_operand.hbm [shape: f32[128,256], index: 2, kind: input, shape index: {}]
  %s3 = inlined_call_operand.hbm [shape: f32[4,128], index: 3, kind: output, shape index: {}]
  %s4 = sld [smem:[#allocation0]]
  $region42: #{tpu_custom_call.1} parent=0
    _
  %s6 = ssub.s32 1, %s4
  %s7 = scalar_select 0, %s6, %s4
  $region1: #{tpu_custom_call.1} parent=0
    #allocation3 [shape = 'u8[4096]{0}', space=vmem, size = 0x1000, scoped, tag = 'input window, operand 0, single buffered']
    #allocation4 [shape = 's32[1]{0}', space=sflag, size = 0x4, scoped, tag = 'scoped memory for tpu_custom_call.1']
    #allocation5 [shape = 's32[1]{0}', space=sflag, size = 0x4, scoped, tag = 'scoped memory for tpu_custom_call.1']
    #allocation6 [shape = 'u8[131072]{0}', space=vmem, size = 0x20000, scoped, tag = 'input window, operand 1, single buffered']
    #allocation7 [shape = 's32[1]{0}', space=sflag, size = 0x4, scoped, tag = 'scoped memory for tpu_custom_call.1']
    #allocation8 [shape = 'u8[131072]{0}', space=vmem, size = 0x20000, scoped, tag = 'input window, operand 2, single buffered']
    #allocation9 [shape = 'u8[2048]{0}', space=vmem, size = 0x800, scoped, tag = 'output window, operand 0, single buffered']
    %8 = vsyncpa [#allocation4], 0
    %9 = vsyncpa [#allocation7], 0
    %10 = vsyncpa [#allocation5], 0
    // Predicated region
    $region2: #{tpu_custom_call.1} parent=1 // pred_check
      _
    $region3: #{tpu_custom_call.1} parent=1 // pred_check_branch
      %12 = sbr.rel (0) target = $region5
    $region4: #{tpu_custom_call.1} parent=1 // pred_region
      %s14 = ssub.s32 128, 128
      %15 = vsyncadd [#allocation4], %s14
      %s17 = sshll.u32 [#allocation3], 4
      %s18 = int_to_ptr.vmem [resolvable:$true] %s17
      %20 = dma.hbm_to_vmem [thread:$0]  %s0, 128, %s18, [#allocation4]
    $region5: #{tpu_custom_call.1} parent=1 // pred_fallthru
      _
    // Predicated region
    $region6: #{tpu_custom_call.1} parent=1 // pred_check
      _
    $region7: #{tpu_custom_call.1} parent=1 // pred_check_branch
      %22 = sbr.rel (0) target = $region9
    $region8: #{tpu_custom_call.1} parent=1 // pred_region
      %s24 = ssub.s32 4096, 4096
      %25 = vsyncadd [#allocation7], %s24
      %s26 = sshll.u32 [#allocation6], 4
      %s27 = int_to_ptr.vmem [resolvable:$true] %s26
      %32 = dma.hbm_to_vmem [thread:$0]  %s1, 4096, %s27, [#allocation7], 128, 128, 8
    $region9: #{tpu_custom_call.1} parent=1 // pred_fallthru
      _
    // Predicated region
    $region10: #{tpu_custom_call.1} parent=1 // pred_check
      _
    $region11: #{tpu_custom_call.1} parent=1 // pred_check_branch
      %34 = sbr.rel (0) target = $region13
    $region12: #{tpu_custom_call.1} parent=1 // pred_region
      %s36 = ssub.s32 4096, 4096
      %37 = vsyncadd [#allocation7], %s36
      %s38 = sshll.u32 [#allocation8], 4
      %s39 = int_to_ptr.vmem [resolvable:$true] %s38
      %44 = dma.hbm_to_vmem [thread:$0]  %s2, 4096, %s39, [#allocation7], 256, 256, 16
    $region13: #{tpu_custom_call.1} parent=1 // pred_fallthru
      _
    // Predicated region
    $region14: #{tpu_custom_call.1} parent=1 // pred_check
      _
    $region15: #{tpu_custom_call.1} parent=1 // pred_check_branch
      %46 = sbr.rel (0) target = $region17
    $region16: #{tpu_custom_call.1} parent=1 // pred_region
      %47 = dma.done [#allocation4], 128
    $region17: #{tpu_custom_call.1} parent=1 // pred_fallthru
      _
    // Predicated region
    $region18: #{tpu_custom_call.1} parent=1 // pred_check
      _
    $region19: #{tpu_custom_call.1} parent=1 // pred_check_branch
      %49 = sbr.rel (0) target = $region21
    $region20: #{tpu_custom_call.1} parent=1 // pred_region
      %50 = dma.done [#allocation7], 4096
    $region21: #{tpu_custom_call.1} parent=1 // pred_fallthru
      _
    // Predicated region
    $region22: #{tpu_custom_call.1} parent=1 // pred_check
      _
    $region23: #{tpu_custom_call.1} parent=1 // pred_check_branch
      %52 = sbr.rel (0) target = $region25
    $region24: #{tpu_custom_call.1} parent=1 // pred_region
      %53 = dma.done [#allocation7], 4096
    $region25: #{tpu_custom_call.1} parent=1 // pred_fallthru
      _
    %p54 = scmp.eq.s32.totalorder 0, 0
    // Predicated region
    $region26: #{tpu_custom_call.1} parent=1 // pred_check
      %p55 = pneg %p54
    $region27: #{tpu_custom_call.1} parent=1 // pred_check_branch
      %57 = sbr.rel (%p55) target = $region29
    $region28: #{tpu_custom_call.1} parent=1 // pred_region
      %58 = vst [vmem:[#allocation2] sm:$0xf] 0.0
    $region29: #{tpu_custom_call.1} parent=1 // pred_fallthru
      _
    %v59 = vld [vmem:[#allocation3] sm:$0x3f]
    %v60 = vld [vmem:[#allocation6] sm:$0xff]
    %v61 = vld [vmem:[#allocation6 + $0x8] sm:$0xff]
    %v62 = vld [vmem:[#allocation6 + $0x10] sm:$0xff]
    %v63 = vld [vmem:[#allocation6 + $0x18] sm:$0xff]
    %v64 = vld [vmem:[#allocation6 + $0x20] sm:$0xff]
    %v65 = vld [vmem:[#allocation6 + $0x28] sm:$0xff]
    %v66 = vld [vmem:[#allocation6 + $0x30] sm:$0xff]
    %v67 = vld [vmem:[#allocation6 + $0x38] sm:$0xff]
    %v68 = vld [vmem:[#allocation6 + $0x40] sm:$0xff]
    %v69 = vld [vmem:[#allocation6 + $0x48] sm:$0xff]
    %v70 = vld [vmem:[#allocation6 + $0x50] sm:$0xff]
    %v71 = vld [vmem:[#allocation6 + $0x58] sm:$0xff]
    %v72 = vld [vmem:[#allocation6 + $0x60] sm:$0xff]
    %v73 = vld [vmem:[#allocation6 + $0x68] sm:$0xff]
    %v74 = vld [vmem:[#allocation6 + $0x70] sm:$0xff]
    %v75 = vld [vmem:[#allocation6 + $0x78] sm:$0xff]
    %v76 = vld [vmem:[#allocation6 + $0x80] sm:$0xff]
    %v77 = vld [vmem:[#allocation6 + $0x88] sm:$0xff]
    %v78 = vld [vmem:[#allocation6 + $0x90] sm:$0xff]
    %v79 = vld [vmem:[#allocation6 + $0x98] sm:$0xff]
    %v80 = vld [vmem:[#allocation6 + $0xa0] sm:$0xff]
    %v81 = vld [vmem:[#allocation6 + $0xa8] sm:$0xff]
    %v82 = vld [vmem:[#allocation6 + $0xb0] sm:$0xff]
    %v83 = vld [vmem:[#allocation6 + $0xb8] sm:$0xff]
    %v84 = vld [vmem:[#allocation6 + $0xc0] sm:$0xff]
    %v85 = vld [vmem:[#allocation6 + $0xc8] sm:$0xff]
    %v86 = vld [vmem:[#allocation6 + $0xd0] sm:$0xff]
    %v87 = vld [vmem:[#allocation6 + $0xd8] sm:$0xff]
    %v88 = vld [vmem:[#allocation6 + $0xe0] sm:$0xff]
    %v89 = vld [vmem:[#allocation6 + $0xe8] sm:$0xff]
    %v90 = vld [vmem:[#allocation6 + $0xf0] sm:$0xff]
    %v91 = vld [vmem:[#allocation6 + $0xf8] sm:$0xff]
    %v92 = vld [vmem:[#allocation8] sm:$0xff]
    %v93 = vld [vmem:[#allocation8 + $0x8] sm:$0xff]
    %v94 = vld [vmem:[#allocation8 + $0x10] sm:$0xff]
    %v95 = vld [vmem:[#allocation8 + $0x18] sm:$0xff]
    %v96 = vld [vmem:[#allocation8 + $0x20] sm:$0xff]
    %v97 = vld [vmem:[#allocation8 + $0x28] sm:$0xff]
    %v98 = vld [vmem:[#allocation8 + $0x30] sm:$0xff]
    %v99 = vld [vmem:[#allocation8 + $0x38] sm:$0xff]
    %v100 = vld [vmem:[#allocation8 + $0x40] sm:$0xff]
    %v101 = vld [vmem:[#allocation8 + $0x48] sm:$0xff]
    %v102 = vld [vmem:[#allocation8 + $0x50] sm:$0xff]
    %v103 = vld [vmem:[#allocation8 + $0x58] sm:$0xff]
    %v104 = vld [vmem:[#allocation8 + $0x60] sm:$0xff]
    %v105 = vld [vmem:[#allocation8 + $0x68] sm:$0xff]
    %v106 = vld [vmem:[#allocation8 + $0x70] sm:$0xff]
    %v107 = vld [vmem:[#allocation8 + $0x78] sm:$0xff]
    %v108 = vld [vmem:[#allocation8 + $0x80] sm:$0xff]
    %v109 = vld [vmem:[#allocation8 + $0x88] sm:$0xff]
    %v110 = vld [vmem:[#allocation8 + $0x90] sm:$0xff]
    %v111 = vld [vmem:[#allocation8 + $0x98] sm:$0xff]
    %v112 = vld [vmem:[#allocation8 + $0xa0] sm:$0xff]
    %v113 = vld [vmem:[#allocation8 + $0xa8] sm:$0xff]
    %v114 = vld [vmem:[#allocation8 + $0xb0] sm:$0xff]
    %v115 = vld [vmem:[#allocation8 + $0xb8] sm:$0xff]
    %v116 = vld [vmem:[#allocation8 + $0xc0] sm:$0xff]
    %v117 = vld [vmem:[#allocation8 + $0xc8] sm:$0xff]
    %v118 = vld [vmem:[#allocation8 + $0xd0] sm:$0xff]
    %v119 = vld [vmem:[#allocation8 + $0xd8] sm:$0xff]
    %v120 = vld [vmem:[#allocation8 + $0xe0] sm:$0xff]
    %v121 = vld [vmem:[#allocation8 + $0xe8] sm:$0xff]
    %v122 = vld [vmem:[#allocation8 + $0xf0] sm:$0xff]
    %v123 = vld [vmem:[#allocation8 + $0xf8] sm:$0xff]
    %124 = vmatprep.subr.mxu0 0.0
    %125 = vmatpush1.xpose.msra.mxu0 %v60
    %126 = vmatprep.subr.mxu0 0.0
    %127 = vmatpush1.xpose.msra.mxu0 %v61
    %128 = vmatprep.subr.mxu0 0.0
    %129 = vmatpush1.xpose.msra.mxu0 %v62
    %130 = vmatprep.subr.mxu0 0.0
    %131 = vmatpush1.xpose.msra.mxu0 %v63
    %132 = vmatprep.subr.mxu0 0.0
    %133 = vmatpush1.xpose.msra.mxu0 %v64
    %134 = vmatprep.subr.mxu0 0.0
    %135 = vmatpush1.xpose.msra.mxu0 %v65
    %136 = vmatprep.subr.mxu0 0.0
    %137 = vmatpush1.xpose.msra.mxu0 %v66
    %138 = vmatprep.subr.mxu0 0.0
    %139 = vmatpush1.xpose.msra.mxu0 %v67
    %140 = vmatprep.subr.mxu0 0.0
    %141 = vmatpush1.xpose.msra.mxu0 %v68
    %142 = vmatprep.subr.mxu0 0.0
    %143 = vmatpush1.xpose.msra.mxu0 %v69
    %144 = vmatprep.subr.mxu0 0.0
    %145 = vmatpush1.xpose.msra.mxu0 %v70
    %146 = vmatprep.subr.mxu0 0.0
    %147 = vmatpush1.xpose.msra.mxu0 %v71
    %148 = vmatprep.subr.mxu0 0.0
    %149 = vmatpush1.xpose.msra.mxu0 %v72
    %150 = vmatprep.subr.mxu0 0.0
    %151 = vmatpush1.xpose.msra.mxu0 %v73
    %152 = vmatprep.subr.mxu0 0.0
    %153 = vmatpush1.xpose.msra.mxu0 %v74
    %154 = vmatprep.subr.mxu0 0.0
    %155 = vmatpush1.xpose.msra.mxu0 %v75
    %156 = vmatprep.subr.mxu0 0.0
    %157 = vmatpush1.xpose.msra.mxu0 %v76
    %158 = vmatprep.subr.mxu0 0.0
    %159 = vmatpush1.xpose.msra.mxu0 %v77
    %160 = vmatprep.subr.mxu0 0.0
    %161 = vmatpush1.xpose.msra.mxu0 %v78
    %162 = vmatprep.subr.mxu0 0.0
    %163 = vmatpush1.xpose.msra.mxu0 %v79
    %164 = vmatprep.subr.mxu0 0.0
    %165 = vmatpush1.xpose.msra.mxu0 %v80
    %166 = vmatprep.subr.mxu0 0.0
    %167 = vmatpush1.xpose.msra.mxu0 %v81
    %168 = vmatprep.subr.mxu0 0.0
    %169 = vmatpush1.xpose.msra.mxu0 %v82
    %170 = vmatprep.subr.mxu0 0.0
    %171 = vmatpush1.xpose.msra.mxu0 %v83
    %172 = vmatprep.subr.mxu0 0.0
    %173 = vmatpush1.xpose.msra.mxu0 %v84
    %174 = vmatprep.subr.mxu0 0.0
    %175 = vmatpush1.xpose.msra.mxu0 %v85
    %176 = vmatprep.subr.mxu0 0.0
    %177 = vmatpush1.xpose.msra.mxu0 %v86
    %178 = vmatprep.subr.mxu0 0.0
    %179 = vmatpush1.xpose.msra.mxu0 %v87
    %180 = vmatprep.subr.mxu0 0.0
    %181 = vmatpush1.xpose.msra.mxu0 %v88
    %182 = vmatprep.subr.mxu0 0.0
    %183 = vmatpush1.xpose.msra.mxu0 %v89
    %184 = vmatprep.subr.mxu0 0.0
    %185 = vmatpush1.xpose.msra.mxu0 %v90
    %186 = vmatprep.subr.mxu0 0.0
    %187 = vmatpush1.xpose.msra.mxu0 %v91
    %188 = vmatprep.mubr.f32.mxu0 0.0
    %189 = vmatmul.mubr.f32.gmra.mrb[0].mxu0 %v59
    %v190 = vpop.f32.mrb[0].mxu0
    %v191 = vadd.f32 0.0, %v190
    %v192 = vpop.f32.mrb[0].mxu0
    %v193 = vadd.f32 0.0, %v192
    %194 = vdwg.mxu0
    %v197 = vrot.slane %v191, 6
    %v198 = vrot.slane %v193, 6
    %v201 = vsub.f32 %v191, %v197
    %v202 = vsub.f32 %v193, %v198
    %v205 = vrot.slane %v201, 2
    %v206 = vrot.slane %v202, 2
    %209 = vmatprep.subr.mxu0 %v93
    %210 = vmatpush1.xpose.msra.mxu0 %v92
    %211 = vmatprep.subr.mxu0 %v95
    %212 = vmatpush1.xpose.msra.mxu0 %v94
    %213 = vmatprep.subr.mxu0 %v97
    %214 = vmatpush1.xpose.msra.mxu0 %v96
    %215 = vmatprep.subr.mxu0 %v99
    %216 = vmatpush1.xpose.msra.mxu0 %v98
    %217 = vmatprep.subr.mxu0 %v101
    %218 = vmatpush1.xpose.msra.mxu0 %v100
    %219 = vmatprep.subr.mxu0 %v103
    %220 = vmatpush1.xpose.msra.mxu0 %v102
    %221 = vmatprep.subr.mxu0 %v105
    %222 = vmatpush1.xpose.msra.mxu0 %v104
    %223 = vmatprep.subr.mxu0 %v107
    %224 = vmatpush1.xpose.msra.mxu0 %v106
    %225 = vmatprep.subr.mxu0 %v109
    %226 = vmatpush1.xpose.msra.mxu0 %v108
    %227 = vmatprep.subr.mxu0 %v111
    %228 = vmatpush1.xpose.msra.mxu0 %v110
    %229 = vmatprep.subr.mxu0 %v113
    %230 = vmatpush1.xpose.msra.mxu0 %v112
    %231 = vmatprep.subr.mxu0 %v115
    %232 = vmatpush1.xpose.msra.mxu0 %v114
    %233 = vmatprep.subr.mxu0 %v117
    %234 = vmatpush1.xpose.msra.mxu0 %v116
    %235 = vmatprep.subr.mxu0 %v119
    %236 = vmatpush1.xpose.msra.mxu0 %v118
    %237 = vmatprep.subr.mxu0 %v121
    %238 = vmatpush1.xpose.msra.mxu0 %v120
    %239 = vmatprep.subr.mxu0 %v123
    %240 = vmatpush1.xpose.msra.mxu0 %v122
    %241 = vmatprep.subr.mxu0 0.0
    %242 = vmatpush1.xpose.msra.mxu0 0.0
    %243 = vmatprep.subr.mxu0 0.0
    %244 = vmatpush1.xpose.msra.mxu0 0.0
    %245 = vmatprep.subr.mxu0 0.0
    %246 = vmatpush1.xpose.msra.mxu0 0.0
    %247 = vmatprep.subr.mxu0 0.0
    %248 = vmatpush1.xpose.msra.mxu0 0.0
    %249 = vmatprep.subr.mxu0 0.0
    %250 = vmatpush1.xpose.msra.mxu0 0.0
    %251 = vmatprep.subr.mxu0 0.0
    %252 = vmatpush1.xpose.msra.mxu0 0.0
    %253 = vmatprep.subr.mxu0 0.0
    %254 = vmatpush1.xpose.msra.mxu0 0.0
    %255 = vmatprep.subr.mxu0 0.0
    %256 = vmatpush1.xpose.msra.mxu0 0.0
    %257 = vmatprep.subr.mxu0 0.0
    %258 = vmatpush1.xpose.msra.mxu0 0.0
    %259 = vmatprep.subr.mxu0 0.0
    %260 = vmatpush1.xpose.msra.mxu0 0.0
    %261 = vmatprep.subr.mxu0 0.0
    %262 = vmatpush1.xpose.msra.mxu0 0.0
    %263 = vmatprep.subr.mxu0 0.0
    %264 = vmatpush1.xpose.msra.mxu0 0.0
    %265 = vmatprep.subr.mxu0 0.0
    %266 = vmatpush1.xpose.msra.mxu0 0.0
    %267 = vmatprep.subr.mxu0 0.0
    %268 = vmatpush1.xpose.msra.mxu0 0.0
    %269 = vmatprep.subr.mxu0 0.0
    %270 = vmatpush1.xpose.msra.mxu0 0.0
    %271 = vmatprep.subr.mxu0 0.0
    %272 = vmatpush1.xpose.msra.mxu0 0.0
    %273 = vmatprep.mubr.f32.mxu0 %v206
    %274 = vmatmul.mubr.f32.gmra.mrb[0].mxu0 %v205
    %v275 = vpop.f32.mrb[0].mxu0
    %v276 = vadd.f32 0.0, %v275
    %v277 = vpop.f32.mrb[0].mxu0
    %278 = vdwg.mxu0
    %v279 = vld [vmem:[#allocation2] sm:$0xf]
    %v280 = vadd.f32 %v279, %v276
    %281 = vst [vmem:[#allocation2] sm:$0xf] %v280
    // Predicated region
    $region30: #{tpu_custom_call.1} parent=1 // pred_check
      %p282 = pneg %p54
    $region31: #{tpu_custom_call.1} parent=1 // pred_check_branch
      %284 = sbr.rel (%p282) target = $region33
    $region32: #{tpu_custom_call.1} parent=1 // pred_region
      %v285 = vld [vmem:[#allocation2] sm:$0xf]
      %vm286 = vcmp.gt.f32.partialorder %v285, 0.1
      %v287 = vsel %vm286, 1, 0
      %v288 = vcvt.s32.f32 %v287
      %289 = vst [vmem:[#allocation9] sm:$0xf] %v288
    $region33: #{tpu_custom_call.1} parent=1 // pred_fallthru
      _
    // Predicated region
    $region34: #{tpu_custom_call.1} parent=1 // pred_check
      _
    $region35: #{tpu_custom_call.1} parent=1 // pred_check_branch
      %291 = sbr.rel (0) target = $region37
    $region36: #{tpu_custom_call.1} parent=1 // pred_region
      %s293 = ssub.s32 64, 64
      %294 = vsyncadd [#allocation5], %s293
      %s296 = sshll.u32 [#allocation9], 4
      %s297 = int_to_ptr.vmem [resolvable:$true] %s296
      %299 = dma.vmem_to_hbm [thread:$0]  %s297, 64, %s3, [#allocation5]
    $region37: #{tpu_custom_call.1} parent=1 // pred_fallthru
      _
    // Predicated region
    $region38: #{tpu_custom_call.1} parent=1 // pred_check
      _
    $region39: #{tpu_custom_call.1} parent=1 // pred_check_branch
      %301 = sbr.rel (0) target = $region41
    $region40: #{tpu_custom_call.1} parent=1 // pred_region
      %302 = dma.done [#allocation5], 64
    $region41: #{tpu_custom_call.1} parent=1 // pred_fallthru
      _
    %303 = vsyncpa [#allocation4], 1
    %304 = vsyncpa [#allocation7], 1
    %305 = vsyncpa [#allocation5], 1

</llo_original>
